<compile_context>
chip_gen: v7x
topology: tpu7x:2x2x1
jax: 0.10.0
libtpu: 0.0.40
codegen_flags: <defaults>
</compile_context>

<pallas_src>
import jax
import jax.numpy as jnp
from jax.experimental import pallas as pl
from jax.experimental.pallas import tpu as pltpu


def permute_linear_kernel(x_ref, w_ref, b_ref, o_ref):
    # x_ref: (TB, C_in, TS)   w_ref: (C_out, C_in)   b_ref: (C_out, 1)
    # o_ref: (TB, TS, C_out)  -- torch output layout written directly (fused permute)
    w = w_ref[...]                       # (C_out, C_in)
    TB, _, TS = x_ref.shape              # static block shape
    C_out = w.shape[0]
    # Hoisted out of the batch loop: JAX does not CSE broadcast_in_dim.
    bias = jnp.broadcast_to(b_ref[...], (C_out, TS))
    for bi in range(TB):                 # tiny static batch -> unroll; large B goes on the grid
        x = x_ref[bi]                    # (C_in, TS)
        acc = jnp.dot(w, x, preferred_element_type=jnp.float32)   # MXU, S on lanes
        # Small XLU transpose of (C_out, TS) -> torch (TS, C_out) layout.
        o_ref[bi] = (acc + bias).T.astype(o_ref.dtype)


def _choose_s_tiling(S, max_ts=2048):
    """Pick (S_pad, TS, num_tiles).

    TS is a multiple of 128 (lane-aligned blocks) that divides S_pad, capped at
    max_ts, and chosen to give >= 2 tiles so v7x's two TensorCores both get
    work on the 'parallel' axis.  Tiny S falls back to a single whole-S block
    (no padding) -- per-step overhead is irrelevant there.
    """
    if S < 256:
        return S, S, 1
    S_pad = pl.cdiv(S, 128) * 128        # pad the streamed axis to a lane multiple
    n128 = S_pad // 128
    ts = 128
    for m in range(1, n128 // 2 + 1):    # keep at least 2 grid steps
        cand = m * 128
        if cand <= max_ts and n128 % m == 0:
            ts = cand
    return S_pad, ts, S_pad // ts


def permute_linear(x, w, b, *, max_s_tile=2048):
    """x: (B, C_in, S), w: (C_out, C_in), b: (C_out,) -> (B, S, C_out).

    Equivalent to torch: F.linear(x.permute(0, 2, 1), w, b).
    """
    B, C_in, S = x.shape
    C_out = w.shape[0]
    b2d = b.reshape(C_out, 1)

    S_pad, TS, num_s = _choose_s_tiling(S, max_s_tile)
    if S_pad != S:
        # Pad the streamed axis once; padded rows are sliced off below.
        x = jnp.pad(x, ((0, 0), (0, 0), (0, S_pad - S)))

    # Tiny static B stays in one block (unrolled in-kernel); larger B is
    # sharded onto a second 'parallel' grid axis (bounds code size / vregs,
    # keeps per-step VMEM flat, and feeds both v7x TensorCores).
    TB = B if B <= 4 else 1
    num_b = B // TB

    out = pl.pallas_call(
        permute_linear_kernel,
        out_shape=jax.ShapeDtypeStruct((B, S_pad, C_out), x.dtype),
        grid_spec=pl.GridSpec(
            grid=(num_b, num_s),
            in_specs=[
                pl.BlockSpec((TB, C_in, TS), lambda bi, si: (bi, 0, si)),
                pl.BlockSpec((C_out, C_in), lambda bi, si: (0, 0)),
                pl.BlockSpec((C_out, 1), lambda bi, si: (0, 0)),
            ],
            out_specs=pl.BlockSpec((TB, TS, C_out), lambda bi, si: (bi, si, 0)),
        ),
        compiler_params=pltpu.CompilerParams(
            dimension_semantics=("parallel", "parallel"),
            # Double-buffered x tile + out tile stays well under this even at
            # TS=2048 / TB=4; covers v5e's 16 MiB scoped default and leaves
            # ample headroom under v7x's 64 MiB physical VMEM.
            vmem_limit_bytes=32 * 1024 * 1024,
        ),
    )(x, w, b2d)

    if S_pad != S:
        out = out[:, :S, :]
    return out


if __name__ == "__main__":
    key = jax.random.PRNGKey(0)
    k_w, k_b, k_x = jax.random.split(key, 3)

    # torch.rand-style params (uniform [0, 1)); shapes from the module spec.
    w = jax.random.uniform(k_w, (5, 10), dtype=jnp.float32)
    b = jax.random.uniform(k_b, (5,), dtype=jnp.float32)

    # Input consistent with forward: (batch=2, in_features=10, seq=8).
    x = jax.random.uniform(k_x, (2, 10, 8), dtype=jnp.float32)

    out = jax.block_until_ready(permute_linear(x, w, b))

    # Reference check (plain JAX): linear(x.permute(0,2,1), w, b)
    ref = jnp.einsum("bcs,oc->bso", x, w) + b
    assert out.shape == (2, 8, 5), out.shape
    assert jnp.allclose(out, ref, atol=1e-5, rtol=1e-5), "mismatch vs reference"

    print("KERNEL_OK")
</pallas_src>

<mosaic_0001>
module attributes {stable_mosaic.version = 11 : i64} {
  func.func @permute_linear_kernel(%arg0: i32, %arg1: i32, %arg2: memref<2x10x8xf32, #tpu.memory_space<vmem>>, %arg3: memref<5x10xf32, #tpu.memory_space<vmem>>, %arg4: memref<5x1xf32, #tpu.memory_space<vmem>>, %arg5: memref<2x8x5xf32, #tpu.memory_space<vmem>>) attributes {dimension_semantics = [#tpu.dimension_semantics<parallel>, #tpu.dimension_semantics<parallel>], iteration_bounds = array<i64: 1, 1>, scalar_prefetch = 0 : i64, scratch_operands = 0 : i64, tpu.core_type = #tpu.core_type<tc>, window_params = [{transform_indices = @transform_0, window_bounds = array<i64: 2, 10, 8>}, {pipeline_mode = #tpu.pipeline_mode<synchronous>, transform_indices = @transform_1, window_bounds = array<i64: 5, 10>}, {pipeline_mode = #tpu.pipeline_mode<synchronous>, transform_indices = @transform_2, window_bounds = array<i64: 5, 1>}, {transform_indices = @transform_3, window_bounds = array<i64: 2, 8, 5>}]} {
    %c0 = arith.constant 0 : index
    %c0_0 = arith.constant 0 : index
    %0 = vector.load %arg3[%c0, %c0_0] : memref<5x10xf32, #tpu.memory_space<vmem>>, vector<5x10xf32>
    %c0_1 = arith.constant 0 : index
    %c0_2 = arith.constant 0 : index
    %1 = vector.load %arg4[%c0_1, %c0_2] : memref<5x1xf32, #tpu.memory_space<vmem>>, vector<5x1xf32>
    %2 = vector.shape_cast %1 : vector<5x1xf32> to vector<5x1xf32>
    %3 = vector.broadcast %2 : vector<5x1xf32> to vector<5x8xf32>
    %c0_3 = arith.constant 0 : index
    %c0_4 = arith.constant 0 : index
    %c0_5 = arith.constant 0 : index
    %4 = vector.load %arg2[%c0_3, %c0_4, %c0_5] : memref<2x10x8xf32, #tpu.memory_space<vmem>>, vector<1x10x8xf32>
    %5 = vector.shape_cast %4 : vector<1x10x8xf32> to vector<10x8xf32>
    %cst = arith.constant dense<0.000000e+00> : vector<5x8xf32>
    %6 = tpu.matmul %0, %5, %cst {dimension_numbers = #tpu.dot_dimension_numbers<[1], [0], [0], [1], [0, 0, 1, 1], [], []>} : vector<5x10xf32>, vector<10x8xf32>, vector<5x8xf32> -> vector<5x8xf32>
    %7 = arith.addf %6, %3 : vector<5x8xf32>
    %8 = tpu.transpose %7, [1, 0] : vector<5x8xf32> -> vector<8x5xf32>
    %c0_6 = arith.constant 0 : index
    %c0_7 = arith.constant 0 : index
    %c0_8 = arith.constant 0 : index
    %9 = vector.load %arg5[%c0_6, %c0_7, %c0_8] : memref<2x8x5xf32, #tpu.memory_space<vmem>>, vector<1x8x5xf32>
    %10 = vector.shape_cast %9 : vector<1x8x5xf32> to vector<8x5xf32>
    %11 = vector.shape_cast %8 : vector<8x5xf32> to vector<1x8x5xf32>
    tpu.vector_store %arg5[%c0_6, %c0_7, %c0_8], %11 {strides = array<i32>} : memref<2x8x5xf32, #tpu.memory_space<vmem>>, vector<1x8x5xf32>,
    %c1 = arith.constant 1 : index
    %c0_9 = arith.constant 0 : index
    %c0_10 = arith.constant 0 : index
    %12 = vector.load %arg2[%c1, %c0_9, %c0_10] : memref<2x10x8xf32, #tpu.memory_space<vmem>>, vector<1x10x8xf32>
    %13 = vector.shape_cast %12 : vector<1x10x8xf32> to vector<10x8xf32>
    %cst_11 = arith.constant dense<0.000000e+00> : vector<5x8xf32>
    %14 = tpu.matmul %0, %13, %cst_11 {dimension_numbers = #tpu.dot_dimension_numbers<[1], [0], [0], [1], [0, 0, 1, 1], [], []>} : vector<5x10xf32>, vector<10x8xf32>, vector<5x8xf32> -> vector<5x8xf32>
    %15 = arith.addf %14, %3 : vector<5x8xf32>
    %16 = tpu.transpose %15, [1, 0] : vector<5x8xf32> -> vector<8x5xf32>
    %c1_12 = arith.constant 1 : index
    %c0_13 = arith.constant 0 : index
    %c0_14 = arith.constant 0 : index
    %17 = vector.load %arg5[%c1_12, %c0_13, %c0_14] : memref<2x8x5xf32, #tpu.memory_space<vmem>>, vector<1x8x5xf32>
    %18 = vector.shape_cast %17 : vector<1x8x5xf32> to vector<8x5xf32>
    %19 = vector.shape_cast %16 : vector<8x5xf32> to vector<1x8x5xf32>
    tpu.vector_store %arg5[%c1_12, %c0_13, %c0_14], %19 {strides = array<i32>} : memref<2x8x5xf32, #tpu.memory_space<vmem>>, vector<1x8x5xf32>,
    return
  }
  func.func @transform_0(%arg0: i32, %arg1: i32) -> (i32, i32, i32) {
    %c0_i32 = arith.constant 0 : i32
    %c0_i32_0 = arith.constant 0 : i32
    return %arg0, %c0_i32, %arg1 : i32, i32, i32
  }
  func.func @transform_1(%arg0: i32, %arg1: i32) -> (i32, i32) {
    %c0_i32 = arith.constant 0 : i32
    %c0_i32_0 = arith.constant 0 : i32
    %c0_i32_1 = arith.constant 0 : i32
    return %c0_i32, %c0_i32_0 : i32, i32
  }
  func.func @transform_2(%arg0: i32, %arg1: i32) -> (i32, i32) {
    %c0_i32 = arith.constant 0 : i32
    %c0_i32_0 = arith.constant 0 : i32
    %c0_i32_1 = arith.constant 0 : i32
    return %c0_i32, %c0_i32_0 : i32, i32
  }
  func.func @transform_3(%arg0: i32, %arg1: i32) -> (i32, i32, i32) {
    %c0_i32 = arith.constant 0 : i32
    %c0_i32_0 = arith.constant 0 : i32
    return %arg0, %arg1, %c0_i32 : i32, i32, i32
  }
}

</mosaic_0001>

<llo_original>
// kernel: tpu_custom_call.1
$region0: #{tpu_custom_call.1}
  #allocation0 [shape = 'u32[]', space=smem, size = 0x4, offset = 0x4, fixed_abs, tag = 'smem constant byte address 0x4 - core index']
  #allocation1 [shape = 'u32[144,128]{1,0:T(1,128)}', space=vmem, size = 0x12000, scoped, tag = 'internal scratch']
  %s0 = inlined_call_operand.vmem [shape: f32[2,10,8], index: 0, kind: input, shape index: {}]
  %s1 = inlined_call_operand.vmem [shape: f32[5,10], index: 1, kind: input, shape index: {}]
  %s2 = inlined_call_operand.vmem [shape: f32[5,1], index: 2, kind: input, shape index: {}]
  %s3 = inlined_call_operand.vmem [shape: f32[2,8,5], index: 3, kind: output, shape index: {}]
  %s4 = sld [smem:[#allocation0]]
  $region22: #{tpu_custom_call.1} parent=0
    _
  %s6 = ssub.s32 1, %s4
  %s7 = scalar_select 0, %s6, %s4
  // Predicated region
  $region2: #{tpu_custom_call.1} parent=0 // pred_check
    _
  $region3: #{tpu_custom_call.1} parent=0 // pred_check_branch
    %9 = sbr.rel (0) target = $region5
  $region4: #{tpu_custom_call.1} parent=0 // pred_region
    _
  $region5: #{tpu_custom_call.1} parent=0 // pred_fallthru
    _
  // Predicated region
  $region6: #{tpu_custom_call.1} parent=0 // pred_check
    _
  $region7: #{tpu_custom_call.1} parent=0 // pred_check_branch
    %11 = sbr.rel (0) target = $region9
  $region8: #{tpu_custom_call.1} parent=0 // pred_region
    _
  $region9: #{tpu_custom_call.1} parent=0 // pred_fallthru
    _
  // Predicated region
  $region10: #{tpu_custom_call.1} parent=0 // pred_check
    _
  $region11: #{tpu_custom_call.1} parent=0 // pred_check_branch
    %13 = sbr.rel (0) target = $region13
  $region12: #{tpu_custom_call.1} parent=0 // pred_region
    _
  $region13: #{tpu_custom_call.1} parent=0 // pred_fallthru
    _
  %v14 = vld [vmem:[%s1] sm:$0x1f]
  %v15 = vld [vmem:[%s2] sm:$0x1f]
  %17 = vset.pattern.permute.xlu0 0
  %18 = vperm.xlu0 %17, %v15
  %v19 = vpop.permute.xlu0 %18
  %v21 = vld [vmem:[%s0] sm:$0xff]
  %v22 = vld [vmem:[%s0 + $0x8] sm:$0x3]
  %vm23 = vcmask 80896
  %v25 = vsel %vm23, %v14, 0
  %vm27 = vcmask 1041408
  %v29 = vsel %vm27, %v22, 0
  %31 = vmatprep.subr.mxu0 0.0
  %32 = vmatpush1.msra.mxu0 %v21
  %33 = vmatprep.subr.mxu0 0.0
  %34 = vmatpush1.msra.mxu0 %v29
  %35 = vmatprep.subr.mxu0 0.0
  %36 = vmatpush1.msra.mxu0 0.0
  %37 = vmatprep.subr.mxu0 0.0
  %38 = vmatpush1.msra.mxu0 0.0
  %39 = vmatprep.subr.mxu0 0.0
  %40 = vmatpush1.msra.mxu0 0.0
  %41 = vmatprep.subr.mxu0 0.0
  %42 = vmatpush1.msra.mxu0 0.0
  %43 = vmatprep.subr.mxu0 0.0
  %44 = vmatpush1.msra.mxu0 0.0
  %45 = vmatprep.subr.mxu0 0.0
  %46 = vmatpush1.msra.mxu0 0.0
  %47 = vmatprep.subr.mxu0 0.0
  %48 = vmatpush1.msra.mxu0 0.0
  %49 = vmatprep.subr.mxu0 0.0
  %50 = vmatpush1.msra.mxu0 0.0
  %51 = vmatprep.subr.mxu0 0.0
  %52 = vmatpush1.msra.mxu0 0.0
  %53 = vmatprep.subr.mxu0 0.0
  %54 = vmatpush1.msra.mxu0 0.0
  %55 = vmatprep.subr.mxu0 0.0
  %56 = vmatpush1.msra.mxu0 0.0
  %57 = vmatprep.subr.mxu0 0.0
  %58 = vmatpush1.msra.mxu0 0.0
  %59 = vmatprep.subr.mxu0 0.0
  %60 = vmatpush1.msra.mxu0 0.0
  %61 = vmatprep.subr.mxu0 0.0
  %62 = vmatpush1.msra.mxu0 0.0
  %63 = vmatprep.subr.mxu0 0.0
  %64 = vmatpush1.msra.mxu0 0.0
  %65 = vmatprep.subr.mxu0 0.0
  %66 = vmatpush1.msra.mxu0 0.0
  %67 = vmatprep.subr.mxu0 0.0
  %68 = vmatpush1.msra.mxu0 0.0
  %69 = vmatprep.subr.mxu0 0.0
  %70 = vmatpush1.msra.mxu0 0.0
  %71 = vmatprep.subr.mxu0 0.0
  %72 = vmatpush1.msra.mxu0 0.0
  %73 = vmatprep.subr.mxu0 0.0
  %74 = vmatpush1.msra.mxu0 0.0
  %75 = vmatprep.subr.mxu0 0.0
  %76 = vmatpush1.msra.mxu0 0.0
  %77 = vmatprep.subr.mxu0 0.0
  %78 = vmatpush1.msra.mxu0 0.0
  %79 = vmatprep.subr.mxu0 0.0
  %80 = vmatpush1.msra.mxu0 0.0
  %81 = vmatprep.subr.mxu0 0.0
  %82 = vmatpush1.msra.mxu0 0.0
  %83 = vmatprep.subr.mxu0 0.0
  %84 = vmatpush1.msra.mxu0 0.0
  %85 = vmatprep.subr.mxu0 0.0
  %86 = vmatpush1.msra.mxu0 0.0
  %87 = vmatprep.subr.mxu0 0.0
  %88 = vmatpush1.msra.mxu0 0.0
  %89 = vmatprep.subr.mxu0 0.0
  %90 = vmatpush1.msra.mxu0 0.0
  %91 = vmatprep.subr.mxu0 0.0
  %92 = vmatpush1.msra.mxu0 0.0
  %93 = vmatprep.subr.mxu0 0.0
  %94 = vmatpush1.msra.mxu0 0.0
  %95 = vmatprep.mubr.f32.mxu0 0.0
  %96 = vmatmul.mubr.f32.gmra.mrb[0].mxu0 %v25
  %v97 = vpop.f32.mrb[0].mxu0
  %v98 = vadd.f32 %v19, %v97
  %v99 = vpop.f32.mrb[0].mxu0
  %100 = vdwg.mxu0
  %101 = vxpose.xlu0.b32.start [1/16] %v98, 128
  %102 = vxpose.xlu0.b32.cont [2/16] 0.0, 128
  %103 = vxpose.xlu0.b32.cont [3/16] 0.0, 128
  %104 = vxpose.xlu0.b32.cont [4/16] 0.0, 128
  %105 = vxpose.xlu0.b32.cont [5/16] 0.0, 128
  %106 = vxpose.xlu0.b32.cont [6/16] 0.0, 128
  %107 = vxpose.xlu0.b32.cont [7/16] 0.0, 128
  %108 = vxpose.xlu0.b32.cont [8/16] 0.0, 128
  %109 = vxpose.xlu0.b32.cont [9/16] 0.0, 128
  %110 = vxpose.xlu0.b32.cont [10/16] 0.0, 128
  %111 = vxpose.xlu0.b32.cont [11/16] 0.0, 128
  %112 = vxpose.xlu0.b32.cont [12/16] 0.0, 128
  %113 = vxpose.xlu0.b32.cont [13/16] 0.0, 128
  %114 = vxpose.xlu0.b32.cont [14/16] 0.0, 128
  %115 = vxpose.xlu0.b32.cont [15/16] 0.0, 128
  %116 = vxpose.xlu0.b32.end [16/16] 0.0, 128
  %v117 = vpop.trf.xlu0
  %v118 = vpop.trf.xlu0
  %v119 = vpop.trf.xlu0
  %v120 = vpop.trf.xlu0
  %v121 = vpop.trf.xlu0
  %v122 = vpop.trf.xlu0
  %v123 = vpop.trf.xlu0
  %v124 = vpop.trf.xlu0
  %v125 = vpop.trf.xlu0
  %v126 = vpop.trf.xlu0
  %v127 = vpop.trf.xlu0
  %v128 = vpop.trf.xlu0
  %v129 = vpop.trf.xlu0
  %v130 = vpop.trf.xlu0
  %v131 = vpop.trf.xlu0
  %v132 = vpop.trf.xlu0
  %vm133 = vcmask 39936
  %134 = vst.msk [vmem:[%s3] sm:$0xff] %vm133, %v117
  %s135 = scalar_lea.vmem %s0, 16
  %v136 = vld [vmem:[%s135] sm:$0xff]
  %v137 = vld [vmem:[%s135 + $0x8] sm:$0x3]
  %v139 = vsel %vm27, %v137, 0
  %141 = vmatprep.subr.mxu0 0.0
  %142 = vmatpush1.msra.mxu0 %v136
  %143 = vmatprep.subr.mxu0 0.0
  %144 = vmatpush1.msra.mxu0 %v139
  %145 = vmatprep.subr.mxu0 0.0
  %146 = vmatpush1.msra.mxu0 0.0
  %147 = vmatprep.subr.mxu0 0.0
  %148 = vmatpush1.msra.mxu0 0.0
  %149 = vmatprep.subr.mxu0 0.0
  %150 = vmatpush1.msra.mxu0 0.0
  %151 = vmatprep.subr.mxu0 0.0
  %152 = vmatpush1.msra.mxu0 0.0
  %153 = vmatprep.subr.mxu0 0.0
  %154 = vmatpush1.msra.mxu0 0.0
  %155 = vmatprep.subr.mxu0 0.0
  %156 = vmatpush1.msra.mxu0 0.0
  %157 = vmatprep.subr.mxu0 0.0
  %158 = vmatpush1.msra.mxu0 0.0
  %159 = vmatprep.subr.mxu0 0.0
  %160 = vmatpush1.msra.mxu0 0.0
  %161 = vmatprep.subr.mxu0 0.0
  %162 = vmatpush1.msra.mxu0 0.0
  %163 = vmatprep.subr.mxu0 0.0
  %164 = vmatpush1.msra.mxu0 0.0
  %165 = vmatprep.subr.mxu0 0.0
  %166 = vmatpush1.msra.mxu0 0.0
  %167 = vmatprep.subr.mxu0 0.0
  %168 = vmatpush1.msra.mxu0 0.0
  %169 = vmatprep.subr.mxu0 0.0
  %170 = vmatpush1.msra.mxu0 0.0
  %171 = vmatprep.subr.mxu0 0.0
  %172 = vmatpush1.msra.mxu0 0.0
  %173 = vmatprep.subr.mxu0 0.0
  %174 = vmatpush1.msra.mxu0 0.0
  %175 = vmatprep.subr.mxu0 0.0
  %176 = vmatpush1.msra.mxu0 0.0
  %177 = vmatprep.subr.mxu0 0.0
  %178 = vmatpush1.msra.mxu0 0.0
  %179 = vmatprep.subr.mxu0 0.0
  %180 = vmatpush1.msra.mxu0 0.0
  %181 = vmatprep.subr.mxu0 0.0
  %182 = vmatpush1.msra.mxu0 0.0
  %183 = vmatprep.subr.mxu0 0.0
  %184 = vmatpush1.msra.mxu0 0.0
  %185 = vmatprep.subr.mxu0 0.0
  %186 = vmatpush1.msra.mxu0 0.0
  %187 = vmatprep.subr.mxu0 0.0
  %188 = vmatpush1.msra.mxu0 0.0
  %189 = vmatprep.subr.mxu0 0.0
  %190 = vmatpush1.msra.mxu0 0.0
  %191 = vmatprep.subr.mxu0 0.0
  %192 = vmatpush1.msra.mxu0 0.0
  %193 = vmatprep.subr.mxu0 0.0
  %194 = vmatpush1.msra.mxu0 0.0
  %195 = vmatprep.subr.mxu0 0.0
  %196 = vmatpush1.msra.mxu0 0.0
  %197 = vmatprep.subr.mxu0 0.0
  %198 = vmatpush1.msra.mxu0 0.0
  %199 = vmatprep.subr.mxu0 0.0
  %200 = vmatpush1.msra.mxu0 0.0
  %201 = vmatprep.subr.mxu0 0.0
  %202 = vmatpush1.msra.mxu0 0.0
  %203 = vmatprep.subr.mxu0 0.0
  %204 = vmatpush1.msra.mxu0 0.0
  %205 = vmatprep.mubr.f32.mxu0 0.0
  %206 = vmatmul.mubr.f32.gmra.mrb[0].mxu0 %v25
  %v207 = vpop.f32.mrb[0].mxu0
  %v208 = vadd.f32 %v19, %v207
  %v209 = vpop.f32.mrb[0].mxu0
  %210 = vdwg.mxu0
  %211 = vxpose.xlu0.b32.start [1/16] %v208, 128
  %212 = vxpose.xlu0.b32.cont [2/16] 0.0, 128
  %213 = vxpose.xlu0.b32.cont [3/16] 0.0, 128
  %214 = vxpose.xlu0.b32.cont [4/16] 0.0, 128
  %215 = vxpose.xlu0.b32.cont [5/16] 0.0, 128
  %216 = vxpose.xlu0.b32.cont [6/16] 0.0, 128
  %217 = vxpose.xlu0.b32.cont [7/16] 0.0, 128
  %218 = vxpose.xlu0.b32.cont [8/16] 0.0, 128
  %219 = vxpose.xlu0.b32.cont [9/16] 0.0, 128
  %220 = vxpose.xlu0.b32.cont [10/16] 0.0, 128
  %221 = vxpose.xlu0.b32.cont [11/16] 0.0, 128
  %222 = vxpose.xlu0.b32.cont [12/16] 0.0, 128
  %223 = vxpose.xlu0.b32.cont [13/16] 0.0, 128
  %224 = vxpose.xlu0.b32.cont [14/16] 0.0, 128
  %225 = vxpose.xlu0.b32.cont [15/16] 0.0, 128
  %226 = vxpose.xlu0.b32.end [16/16] 0.0, 128
  %v227 = vpop.trf.xlu0
  %v228 = vpop.trf.xlu0
  %v229 = vpop.trf.xlu0
  %v230 = vpop.trf.xlu0
  %v231 = vpop.trf.xlu0
  %v232 = vpop.trf.xlu0
  %v233 = vpop.trf.xlu0
  %v234 = vpop.trf.xlu0
  %v235 = vpop.trf.xlu0
  %v236 = vpop.trf.xlu0
  %v237 = vpop.trf.xlu0
  %v238 = vpop.trf.xlu0
  %v239 = vpop.trf.xlu0
  %v240 = vpop.trf.xlu0
  %v241 = vpop.trf.xlu0
  %v242 = vpop.trf.xlu0
  %s243 = scalar_lea.vmem %s3, 8
  %244 = vst.msk [vmem:[%s243] sm:$0xff] %vm133, %v227
  // Predicated region
  $region14: #{tpu_custom_call.1} parent=0 // pred_check
    _
  $region15: #{tpu_custom_call.1} parent=0 // pred_check_branch
    %246 = sbr.rel (0) target = $region17
  $region16: #{tpu_custom_call.1} parent=0 // pred_region
    _
  $region17: #{tpu_custom_call.1} parent=0 // pred_fallthru
    _
  // Predicated region
  $region18: #{tpu_custom_call.1} parent=0 // pred_check
    _
  $region19: #{tpu_custom_call.1} parent=0 // pred_check_branch
    %248 = sbr.rel (0) target = $region21
  $region20: #{tpu_custom_call.1} parent=0 // pred_region
    _
  $region21: #{tpu_custom_call.1} parent=0 // pred_fallthru
    _

</llo_original>
